<compile_context>
chip_gen: v7x
topology: tpu7x:2x2x1
jax: 0.10.0
libtpu: 0.0.40
codegen_flags: <defaults>
</compile_context>

<pallas_src>
import jax
import jax.numpy as jnp
from jax.experimental import pallas as pl
from jax.experimental.pallas import tpu as pltpu


def _round_up(x, m):
    return (x + m - 1) // m * m


def resblock_kernel(x_ref, w1_ref, w2_ref, b1_ref, b2_ref, o_ref):
    # x_ref: (nb, C, tl) slab of the NCL input; channels on sublanes, L on lanes.
    w1 = w1_ref[...]            # (C, C)  BN1-scale-folded conv1 weight
    w2 = w2_ref[...]            # (C, C)  BN2-scale-folded conv2 weight
    b1 = b1_ref[...]            # (C, 1)  BN1 shift
    b2 = b2_ref[...]            # (C, 1)  BN2 shift
    nb = x_ref.shape[0]         # static, small
    for b in range(nb):
        x = x_ref[b]                                                    # (C, tl)
        h = jnp.dot(w1, x, preferred_element_type=jnp.float32)
        h = jnp.maximum(h + b1, 0.0)                                    # BN1 shift + ReLU
        y = jnp.dot(w2, h, preferred_element_type=jnp.float32)
        o_ref[b] = (y + b2 + x).astype(o_ref.dtype)                     # BN2 shift + residual


def _choose_l_tile(L, C, tile_bytes_target):
    """Pick a lane-aligned L tile (multiple of 128) and the padded L."""
    lane = 128
    l128 = _round_up(L, lane)
    # Largest lane-aligned tile whose (C, tl) f32 slab stays near the byte target.
    tl_cap = max(lane, (tile_bytes_target // (C * 4)) // lane * lane)
    if l128 <= tl_cap:
        return l128, l128                       # whole (padded) L in one tile
    # Otherwise trade padding waste against per-step pipeline overhead
    # (~0.35 us/step ~ a couple thousand extra columns of HBM traffic).
    overhead_cols = 2048
    best = None
    for tl in range(lane, tl_cap + 1, lane):
        lpad = _round_up(L, tl)
        cost = lpad + overhead_cols * (lpad // tl)
        if best is None or cost < best[0] or (cost == best[0] and tl > best[2]):
            best = (cost, lpad, tl)
    _, lpad, tl = best
    return tl, lpad


def _largest_divisor_leq(n, cap):
    best = 1
    for d in range(1, n + 1):
        if n % d == 0 and d <= cap:
            best = d
    return best


def resblock_forward(x_ncl, w1, w2, scale1, shift1, scale2, shift2,
                     *, tile_bytes_target=2 * 1024 * 1024):
    """x_ncl: (N, C, L) float32.  Returns (N, C, L)."""
    N, C, L = x_ncl.shape

    # Fold BN scales into the conv weights (scale acts on output channels).
    w1f = (w1 * scale1[:, None]).astype(jnp.float32)   # (C, C)
    w2f = (w2 * scale2[:, None]).astype(jnp.float32)   # (C, C)
    b1 = shift1.reshape(C, 1).astype(jnp.float32)
    b2 = shift2.reshape(C, 1).astype(jnp.float32)

    # --- tiling: large lane-aligned L tiles; pad ragged L instead of tl=L fallback.
    tl, l_pad = _choose_l_tile(L, C, tile_bytes_target)
    x_in = x_ncl
    if l_pad != L:
        x_in = jnp.pad(x_ncl, ((0, 0), (0, 0), (0, l_pad - L)))
    n_l = l_pad // tl

    # --- batch blocking when L is short, so each grid step still moves a big slab.
    if n_l == 1:
        per_batch_bytes = C * tl * 4
        nb = _largest_divisor_leq(N, max(1, tile_bytes_target // per_batch_bytes))
    else:
        nb = 1
    grid = (N // nb, n_l)

    tile_bytes = nb * C * tl * 4
    # Double-buffered in+out plus in-kernel temporaries; keep <=48 MiB for v7x headroom.
    vmem_limit = min(48 * 1024 * 1024, max(32 * 1024 * 1024, 6 * tile_bytes))

    out = pl.pallas_call(
        resblock_kernel,
        out_shape=jax.ShapeDtypeStruct((N, C, l_pad), x_ncl.dtype),
        grid_spec=pltpu.PrefetchScalarGridSpec(
            num_scalar_prefetch=0,
            grid=grid,
            in_specs=[
                pl.BlockSpec((nb, C, tl), lambda n, l: (n, 0, l)),  # x slab (NCL)
                pl.BlockSpec((C, C), lambda n, l: (0, 0)),          # W1' (resident)
                pl.BlockSpec((C, C), lambda n, l: (0, 0)),          # W2' (resident)
                pl.BlockSpec((C, 1), lambda n, l: (0, 0)),          # BN1 shift
                pl.BlockSpec((C, 1), lambda n, l: (0, 0)),          # BN2 shift
            ],
            out_specs=pl.BlockSpec((nb, C, tl), lambda n, l: (n, 0, l)),
        ),
        compiler_params=pltpu.CompilerParams(
            # Both grid axes independent -> megacore sharding on v7x.
            dimension_semantics=("parallel", "parallel"),
            vmem_limit_bytes=vmem_limit,
        ),
    )(x_in, w1f, w2f, b1, b2)

    if l_pad != L:
        out = out[:, :, :L]
    return out
    # TODO(synk): optional bf16 streaming of x/out (keep f32 accumulate) would
    # halve HBM traffic if the accuracy budget allows; kept f32 to match PyTorch.


def _reference(x, w1, w2, s1, b1, s2, b2):
    # Pure-JAX reference of the same folded-BN forward, in NCL layout.
    h = jnp.einsum("oc,ncl->nol", w1, x) * s1[None, :, None] + b1[None, :, None]
    h = jnp.maximum(h, 0.0)
    y = jnp.einsum("oc,ncl->nol", w2, h) * s2[None, :, None] + b2[None, :, None]
    return y + x


def _make_params(key, planes):
    kw1, kw2, kg1, kb1, km1, kv1, kg2, kb2, km2, kv2 = jax.random.split(key, 10)
    eps = 1e-5
    w1 = jax.random.normal(kw1, (planes, planes), dtype=jnp.float32) * 0.1
    w2 = jax.random.normal(kw2, (planes, planes), dtype=jnp.float32) * 0.1
    gamma1 = 1.0 + 0.1 * jax.random.normal(kg1, (planes,), dtype=jnp.float32)
    beta1 = 0.1 * jax.random.normal(kb1, (planes,), dtype=jnp.float32)
    rmean1 = 0.1 * jax.random.normal(km1, (planes,), dtype=jnp.float32)
    rvar1 = 1.0 + 0.1 * jax.random.uniform(kv1, (planes,), dtype=jnp.float32)
    gamma2 = 1.0 + 0.1 * jax.random.normal(kg2, (planes,), dtype=jnp.float32)
    beta2 = 0.1 * jax.random.normal(kb2, (planes,), dtype=jnp.float32)
    rmean2 = 0.1 * jax.random.normal(km2, (planes,), dtype=jnp.float32)
    rvar2 = 1.0 + 0.1 * jax.random.uniform(kv2, (planes,), dtype=jnp.float32)
    scale1 = gamma1 / jnp.sqrt(rvar1 + eps)
    shift1 = beta1 - rmean1 * scale1
    scale2 = gamma2 / jnp.sqrt(rvar2 + eps)
    shift2 = beta2 - rmean2 * scale2
    return w1, w2, scale1, shift1, scale2, shift2


if __name__ == "__main__":
    planes = 32
    key = jax.random.PRNGKey(0)
    kp, kx1, kx2, kx3 = jax.random.split(key, 4)
    params = _make_params(kp, planes)

    # (batch, length, tile_bytes_target) cases:
    #  1) lane-aligned short L  -> batch-blocked single step
    #  2) ragged L              -> wrapper-side pad to a multiple of 128
    #  3) small tile target     -> exercises the multi-L-tile grid path
    cases = [
        (kx1, 2, 512, 2 * 1024 * 1024),
        (kx2, 2, 300, 2 * 1024 * 1024),
        (kx3, 2, 1024, 64 * 1024),
    ]
    for kx, batch, length, tgt in cases:
        x = jax.random.normal(kx, (batch, planes, length), dtype=jnp.float32)
        out = resblock_forward(x, *params, tile_bytes_target=tgt)
        out = jax.block_until_ready(out)
        ref = _reference(x, *params)
        assert out.shape == x.shape, (out.shape, x.shape)
        assert jnp.allclose(out, ref, atol=1e-4, rtol=1e-4), \
            f"mismatch vs reference for shape {(batch, planes, length)}"

    print("KERNEL_OK")
</pallas_src>

<mosaic_0001>
module attributes {stable_mosaic.version = 11 : i64} {
  func.func @resblock_kernel(%arg0: i32, %arg1: i32, %arg2: memref<2x32x512xf32, #tpu.memory_space<vmem>>, %arg3: memref<32x32xf32, #tpu.memory_space<vmem>>, %arg4: memref<32x32xf32, #tpu.memory_space<vmem>>, %arg5: memref<32x1xf32, #tpu.memory_space<vmem>>, %arg6: memref<32x1xf32, #tpu.memory_space<vmem>>, %arg7: memref<2x32x512xf32, #tpu.memory_space<vmem>>) attributes {dimension_semantics = [#tpu.dimension_semantics<parallel>, #tpu.dimension_semantics<parallel>], iteration_bounds = array<i64: 1, 1>, scalar_prefetch = 0 : i64, scratch_operands = 0 : i64, tpu.core_type = #tpu.core_type<tc>, window_params = [{transform_indices = @transform_0, window_bounds = array<i64: 2, 32, 512>}, {pipeline_mode = #tpu.pipeline_mode<synchronous>, transform_indices = @transform_1, window_bounds = array<i64: 32, 32>}, {pipeline_mode = #tpu.pipeline_mode<synchronous>, transform_indices = @transform_2, window_bounds = array<i64: 32, 32>}, {pipeline_mode = #tpu.pipeline_mode<synchronous>, transform_indices = @transform_3, window_bounds = array<i64: 32, 1>}, {pipeline_mode = #tpu.pipeline_mode<synchronous>, transform_indices = @transform_4, window_bounds = array<i64: 32, 1>}, {transform_indices = @transform_5, window_bounds = array<i64: 2, 32, 512>}]} {
    %c0 = arith.constant 0 : index
    %c0_0 = arith.constant 0 : index
    %0 = vector.load %arg3[%c0, %c0_0] : memref<32x32xf32, #tpu.memory_space<vmem>>, vector<32x32xf32>
    %c0_1 = arith.constant 0 : index
    %c0_2 = arith.constant 0 : index
    %1 = vector.load %arg4[%c0_1, %c0_2] : memref<32x32xf32, #tpu.memory_space<vmem>>, vector<32x32xf32>
    %c0_3 = arith.constant 0 : index
    %c0_4 = arith.constant 0 : index
    %2 = vector.load %arg5[%c0_3, %c0_4] : memref<32x1xf32, #tpu.memory_space<vmem>>, vector<32x1xf32>
    %c0_5 = arith.constant 0 : index
    %c0_6 = arith.constant 0 : index
    %3 = vector.load %arg6[%c0_5, %c0_6] : memref<32x1xf32, #tpu.memory_space<vmem>>, vector<32x1xf32>
    %c0_7 = arith.constant 0 : index
    %c0_8 = arith.constant 0 : index
    %c0_9 = arith.constant 0 : index
    %4 = vector.load %arg2[%c0_7, %c0_8, %c0_9] : memref<2x32x512xf32, #tpu.memory_space<vmem>>, vector<1x32x512xf32>
    %5 = vector.shape_cast %4 : vector<1x32x512xf32> to vector<32x512xf32>
    %cst = arith.constant dense<0.000000e+00> : vector<32x512xf32>
    %6 = tpu.matmul %0, %5, %cst {dimension_numbers = #tpu.dot_dimension_numbers<[1], [0], [0], [1], [0, 0, 1, 1], [], []>} : vector<32x32xf32>, vector<32x512xf32>, vector<32x512xf32> -> vector<32x512xf32>
    %7 = vector.broadcast %2 : vector<32x1xf32> to vector<32x512xf32>
    %8 = arith.addf %6, %7 : vector<32x512xf32>
    %cst_10 = arith.constant 0.000000e+00 : f32
    %9 = vector.broadcast %cst_10 : f32 to vector<32x512xf32>
    %10 = arith.maximumf %8, %9 : vector<32x512xf32>
    %cst_11 = arith.constant dense<0.000000e+00> : vector<32x512xf32>
    %11 = tpu.matmul %1, %10, %cst_11 {dimension_numbers = #tpu.dot_dimension_numbers<[1], [0], [0], [1], [0, 0, 1, 1], [], []>} : vector<32x32xf32>, vector<32x512xf32>, vector<32x512xf32> -> vector<32x512xf32>
    %12 = vector.broadcast %3 : vector<32x1xf32> to vector<32x512xf32>
    %13 = arith.addf %11, %12 : vector<32x512xf32>
    %14 = arith.addf %13, %5 : vector<32x512xf32>
    %c0_12 = arith.constant 0 : index
    %c0_13 = arith.constant 0 : index
    %c0_14 = arith.constant 0 : index
    %15 = vector.load %arg7[%c0_12, %c0_13, %c0_14] : memref<2x32x512xf32, #tpu.memory_space<vmem>>, vector<1x32x512xf32>
    %16 = vector.shape_cast %15 : vector<1x32x512xf32> to vector<32x512xf32>
    %17 = vector.shape_cast %14 : vector<32x512xf32> to vector<1x32x512xf32>
    tpu.vector_store %arg7[%c0_12, %c0_13, %c0_14], %17 {strides = array<i32>} : memref<2x32x512xf32, #tpu.memory_space<vmem>>, vector<1x32x512xf32>,
    %c1 = arith.constant 1 : index
    %c0_15 = arith.constant 0 : index
    %c0_16 = arith.constant 0 : index
    %18 = vector.load %arg2[%c1, %c0_15, %c0_16] : memref<2x32x512xf32, #tpu.memory_space<vmem>>, vector<1x32x512xf32>
    %19 = vector.shape_cast %18 : vector<1x32x512xf32> to vector<32x512xf32>
    %cst_17 = arith.constant dense<0.000000e+00> : vector<32x512xf32>
    %20 = tpu.matmul %0, %19, %cst_17 {dimension_numbers = #tpu.dot_dimension_numbers<[1], [0], [0], [1], [0, 0, 1, 1], [], []>} : vector<32x32xf32>, vector<32x512xf32>, vector<32x512xf32> -> vector<32x512xf32>
    %21 = vector.broadcast %2 : vector<32x1xf32> to vector<32x512xf32>
    %22 = arith.addf %20, %21 : vector<32x512xf32>
    %cst_18 = arith.constant 0.000000e+00 : f32
    %23 = vector.broadcast %cst_18 : f32 to vector<32x512xf32>
    %24 = arith.maximumf %22, %23 : vector<32x512xf32>
    %cst_19 = arith.constant dense<0.000000e+00> : vector<32x512xf32>
    %25 = tpu.matmul %1, %24, %cst_19 {dimension_numbers = #tpu.dot_dimension_numbers<[1], [0], [0], [1], [0, 0, 1, 1], [], []>} : vector<32x32xf32>, vector<32x512xf32>, vector<32x512xf32> -> vector<32x512xf32>
    %26 = vector.broadcast %3 : vector<32x1xf32> to vector<32x512xf32>
    %27 = arith.addf %25, %26 : vector<32x512xf32>
    %28 = arith.addf %27, %19 : vector<32x512xf32>
    %c1_20 = arith.constant 1 : index
    %c0_21 = arith.constant 0 : index
    %c0_22 = arith.constant 0 : index
    %29 = vector.load %arg7[%c1_20, %c0_21, %c0_22] : memref<2x32x512xf32, #tpu.memory_space<vmem>>, vector<1x32x512xf32>
    %30 = vector.shape_cast %29 : vector<1x32x512xf32> to vector<32x512xf32>
    %31 = vector.shape_cast %28 : vector<32x512xf32> to vector<1x32x512xf32>
    tpu.vector_store %arg7[%c1_20, %c0_21, %c0_22], %31 {strides = array<i32>} : memref<2x32x512xf32, #tpu.memory_space<vmem>>, vector<1x32x512xf32>,
    return
  }
  func.func @transform_0(%arg0: i32, %arg1: i32) -> (i32, i32, i32) {
    %c0_i32 = arith.constant 0 : i32
    %c0_i32_0 = arith.constant 0 : i32
    return %arg0, %c0_i32, %arg1 : i32, i32, i32
  }
  func.func @transform_1(%arg0: i32, %arg1: i32) -> (i32, i32) {
    %c0_i32 = arith.constant 0 : i32
    %c0_i32_0 = arith.constant 0 : i32
    %c0_i32_1 = arith.constant 0 : i32
    return %c0_i32, %c0_i32_0 : i32, i32
  }
  func.func @transform_2(%arg0: i32, %arg1: i32) -> (i32, i32) {
    %c0_i32 = arith.constant 0 : i32
    %c0_i32_0 = arith.constant 0 : i32
    %c0_i32_1 = arith.constant 0 : i32
    return %c0_i32, %c0_i32_0 : i32, i32
  }
  func.func @transform_3(%arg0: i32, %arg1: i32) -> (i32, i32) {
    %c0_i32 = arith.constant 0 : i32
    %c0_i32_0 = arith.constant 0 : i32
    %c0_i32_1 = arith.constant 0 : i32
    return %c0_i32, %c0_i32_0 : i32, i32
  }
  func.func @transform_4(%arg0: i32, %arg1: i32) -> (i32, i32) {
    %c0_i32 = arith.constant 0 : i32
    %c0_i32_0 = arith.constant 0 : i32
    %c0_i32_1 = arith.constant 0 : i32
    return %c0_i32, %c0_i32_0 : i32, i32
  }
  func.func @transform_5(%arg0: i32, %arg1: i32) -> (i32, i32, i32) {
    %c0_i32 = arith.constant 0 : i32
    %c0_i32_0 = arith.constant 0 : i32
    return %arg0, %c0_i32, %arg1 : i32, i32, i32
  }
}

</mosaic_0001>

<llo_original>
// kernel: tpu_custom_call.1
$region0: #{tpu_custom_call.1}
  #allocation0 [shape = 'u32[]', space=smem, size = 0x4, offset = 0x4, fixed_abs, tag = 'smem constant byte address 0x4 - core index']
  #allocation1 [shape = 'u32[144,128]{1,0:T(1,128)}', space=vmem, size = 0x12000, scoped, tag = 'internal scratch']
  %s0 = inlined_call_operand.hbm [shape: f32[2,32,512], index: 0, kind: input, shape index: {}]
  %s1 = inlined_call_operand.vmem [shape: f32[32,32], index: 1, kind: input, shape index: {}]
  %s2 = inlined_call_operand.vmem [shape: f32[32,32], index: 2, kind: input, shape index: {}]
  %s3 = inlined_call_operand.vmem [shape: f32[32,1], index: 3, kind: input, shape index: {}]
  %s4 = inlined_call_operand.vmem [shape: f32[32,1], index: 4, kind: input, shape index: {}]
  %s5 = inlined_call_operand.hbm [shape: f32[2,32,512], index: 5, kind: output, shape index: {}]
  %s6 = sld [smem:[#allocation0]]
  $region34: #{tpu_custom_call.1} parent=0
    _
  %s8 = ssub.s32 1, %s6
  %s9 = scalar_select 0, %s8, %s6
  $region1: #{tpu_custom_call.1} parent=0
    #allocation2 [shape = 'u8[131072]{0}', space=vmem, size = 0x20000, scoped, tag = 'input window, operand 0, single buffered']
    #allocation3 [shape = 's32[1]{0}', space=sflag, size = 0x4, scoped, tag = 'scoped memory for tpu_custom_call.1']
    #allocation4 [shape = 's32[1]{0}', space=sflag, size = 0x4, scoped, tag = 'scoped memory for tpu_custom_call.1']
    #allocation5 [shape = 'u8[131072]{0}', space=vmem, size = 0x20000, scoped, tag = 'output window, operand 0, single buffered']
    %10 = vsyncpa [#allocation3], 0
    %11 = vsyncpa [#allocation4], 0
    // Predicated region
    $region2: #{tpu_custom_call.1} parent=1 // pred_check
      _
    $region3: #{tpu_custom_call.1} parent=1 // pred_check_branch
      %13 = sbr.rel (0) target = $region5
    $region4: #{tpu_custom_call.1} parent=1 // pred_region
      %s15 = ssub.s32 4096, 4096
      %16 = vsyncadd [#allocation3], %s15
      %s17 = sshll.u32 [#allocation2], 4
      %s18 = int_to_ptr.vmem [resolvable:$true] %s17
      %23 = dma.hbm_to_vmem [thread:$0]  %s0, 4096, %s18, [#allocation3], 512, 512, 32
    $region5: #{tpu_custom_call.1} parent=1 // pred_fallthru
      _
    // Predicated region
    $region6: #{tpu_custom_call.1} parent=1 // pred_check
      _
    $region7: #{tpu_custom_call.1} parent=1 // pred_check_branch
      %25 = sbr.rel (0) target = $region9
    $region8: #{tpu_custom_call.1} parent=1 // pred_region
      _
    $region9: #{tpu_custom_call.1} parent=1 // pred_fallthru
      _
    // Predicated region
    $region10: #{tpu_custom_call.1} parent=1 // pred_check
      _
    $region11: #{tpu_custom_call.1} parent=1 // pred_check_branch
      %27 = sbr.rel (0) target = $region13
    $region12: #{tpu_custom_call.1} parent=1 // pred_region
      _
    $region13: #{tpu_custom_call.1} parent=1 // pred_fallthru
      _
    // Predicated region
    $region14: #{tpu_custom_call.1} parent=1 // pred_check
      _
    $region15: #{tpu_custom_call.1} parent=1 // pred_check_branch
      %29 = sbr.rel (0) target = $region17
    $region16: #{tpu_custom_call.1} parent=1 // pred_region
      _
    $region17: #{tpu_custom_call.1} parent=1 // pred_fallthru
      _
    // Predicated region
    $region18: #{tpu_custom_call.1} parent=1 // pred_check
      _
    $region19: #{tpu_custom_call.1} parent=1 // pred_check_branch
      %31 = sbr.rel (0) target = $region21
    $region20: #{tpu_custom_call.1} parent=1 // pred_region
      _
    $region21: #{tpu_custom_call.1} parent=1 // pred_fallthru
      _
    // Predicated region
    $region22: #{tpu_custom_call.1} parent=1 // pred_check
      _
    $region23: #{tpu_custom_call.1} parent=1 // pred_check_branch
      %33 = sbr.rel (0) target = $region25
    $region24: #{tpu_custom_call.1} parent=1 // pred_region
      %34 = dma.done [#allocation3], 4096
    $region25: #{tpu_custom_call.1} parent=1 // pred_fallthru
      _
    %v35 = vld [vmem:[%s1] sm:$0xff]
    %v36 = vld [vmem:[%s1 + $0x8] sm:$0xff]
    %v37 = vld [vmem:[%s1 + $0x10] sm:$0xff]
    %v38 = vld [vmem:[%s1 + $0x18] sm:$0xff]
    %v39 = vld [vmem:[%s2] sm:$0xff]
    %v40 = vld [vmem:[%s2 + $0x8] sm:$0xff]
    %v41 = vld [vmem:[%s2 + $0x10] sm:$0xff]
    %v42 = vld [vmem:[%s2 + $0x18] sm:$0xff]
    %v43 = vld [vmem:[%s3] sm:$0xff]
    %v44 = vld [vmem:[%s3 + $0x8] sm:$0xff]
    %v45 = vld [vmem:[%s3 + $0x10] sm:$0xff]
    %v46 = vld [vmem:[%s3 + $0x18] sm:$0xff]
    %v47 = vld [vmem:[%s4] sm:$0xff]
    %v48 = vld [vmem:[%s4 + $0x8] sm:$0xff]
    %v49 = vld [vmem:[%s4 + $0x10] sm:$0xff]
    %v50 = vld [vmem:[%s4 + $0x18] sm:$0xff]
    %v51 = vld [vmem:[#allocation2] sm:$0xff]
    %v52 = vld [vmem:[#allocation2 + $0x8] sm:$0xff]
    %v53 = vld [vmem:[#allocation2 + $0x10] sm:$0xff]
    %v54 = vld [vmem:[#allocation2 + $0x18] sm:$0xff]
    %v55 = vld [vmem:[#allocation2 + $0x20] sm:$0xff]
    %v56 = vld [vmem:[#allocation2 + $0x28] sm:$0xff]
    %v57 = vld [vmem:[#allocation2 + $0x30] sm:$0xff]
    %v58 = vld [vmem:[#allocation2 + $0x38] sm:$0xff]
    %v59 = vld [vmem:[#allocation2 + $0x40] sm:$0xff]
    %v60 = vld [vmem:[#allocation2 + $0x48] sm:$0xff]
    %v61 = vld [vmem:[#allocation2 + $0x50] sm:$0xff]
    %v62 = vld [vmem:[#allocation2 + $0x58] sm:$0xff]
    %v63 = vld [vmem:[#allocation2 + $0x60] sm:$0xff]
    %v64 = vld [vmem:[#allocation2 + $0x68] sm:$0xff]
    %v65 = vld [vmem:[#allocation2 + $0x70] sm:$0xff]
    %v66 = vld [vmem:[#allocation2 + $0x78] sm:$0xff]
    %68 = vset.pattern.permute.xlu0 0
    %69 = vperm.xlu0 %68, %v43
    %v70 = vpop.permute.xlu0 %69
    %73 = vset.pattern.permute.xlu0 0
    %74 = vperm.xlu0 %73, %v44
    %v75 = vpop.permute.xlu0 %74
    %78 = vset.pattern.permute.xlu0 0
    %79 = vperm.xlu0 %78, %v45
    %v80 = vpop.permute.xlu0 %79
    %83 = vset.pattern.permute.xlu0 0
    %84 = vperm.xlu0 %83, %v46
    %v85 = vpop.permute.xlu0 %84
    %vm87 = vcmask 261120
    %v89 = vsel %vm87, %v35, 0
    %v92 = vsel %vm87, %v36, 0
    %v95 = vsel %vm87, %v37, 0
    %v98 = vsel %vm87, %v38, 0
    %100 = vmatprep.subr.mxu0 %v52
    %101 = vmatpush1.msra.mxu0 %v51
    %102 = vmatprep.subr.mxu0 %v56
    %103 = vmatpush1.msra.mxu0 %v55
    %104 = vmatprep.subr.mxu0 %v60
    %105 = vmatpush1.msra.mxu0 %v59
    %106 = vmatprep.subr.mxu0 %v64
    %107 = vmatpush1.msra.mxu0 %v63
    %108 = vmatprep.subr.mxu0 0.0
    %109 = vmatpush1.msra.mxu0 0.0
    %110 = vmatprep.subr.mxu0 0.0
    %111 = vmatpush1.msra.mxu0 0.0
    %112 = vmatprep.subr.mxu0 0.0
    %113 = vmatpush1.msra.mxu0 0.0
    %114 = vmatprep.subr.mxu0 0.0
    %115 = vmatpush1.msra.mxu0 0.0
    %116 = vmatprep.subr.mxu0 0.0
    %117 = vmatpush1.msra.mxu0 0.0
    %118 = vmatprep.subr.mxu0 0.0
    %119 = vmatpush1.msra.mxu0 0.0
    %120 = vmatprep.subr.mxu0 0.0
    %121 = vmatpush1.msra.mxu0 0.0
    %122 = vmatprep.subr.mxu0 0.0
    %123 = vmatpush1.msra.mxu0 0.0
    %124 = vmatprep.subr.mxu0 0.0
    %125 = vmatpush1.msra.mxu0 0.0
    %126 = vmatprep.subr.mxu0 0.0
    %127 = vmatpush1.msra.mxu0 0.0
    %128 = vmatprep.subr.mxu0 0.0
    %129 = vmatpush1.msra.mxu0 0.0
    %130 = vmatprep.subr.mxu0 0.0
    %131 = vmatpush1.msra.mxu0 0.0
    %132 = vmatprep.subr.mxu0 0.0
    %133 = vmatpush1.msra.mxu0 0.0
    %134 = vmatprep.subr.mxu0 0.0
    %135 = vmatpush1.msra.mxu0 0.0
    %136 = vmatprep.subr.mxu0 0.0
    %137 = vmatpush1.msra.mxu0 0.0
    %138 = vmatprep.subr.mxu0 0.0
    %139 = vmatpush1.msra.mxu0 0.0
    %140 = vmatprep.subr.mxu0 0.0
    %141 = vmatpush1.msra.mxu0 0.0
    %142 = vmatprep.subr.mxu0 0.0
    %143 = vmatpush1.msra.mxu0 0.0
    %144 = vmatprep.subr.mxu0 0.0
    %145 = vmatpush1.msra.mxu0 0.0
    %146 = vmatprep.subr.mxu0 0.0
    %147 = vmatpush1.msra.mxu0 0.0
    %148 = vmatprep.subr.mxu0 0.0
    %149 = vmatpush1.msra.mxu0 0.0
    %150 = vmatprep.subr.mxu0 0.0
    %151 = vmatpush1.msra.mxu0 0.0
    %152 = vmatprep.subr.mxu0 0.0
    %153 = vmatpush1.msra.mxu0 0.0
    %154 = vmatprep.subr.mxu0 0.0
    %155 = vmatpush1.msra.mxu0 0.0
    %156 = vmatprep.subr.mxu0 0.0
    %157 = vmatpush1.msra.mxu0 0.0
    %158 = vmatprep.subr.mxu0 0.0
    %159 = vmatpush1.msra.mxu0 0.0
    %160 = vmatprep.subr.mxu0 0.0
    %161 = vmatpush1.msra.mxu0 0.0
    %162 = vmatprep.subr.mxu0 0.0
    %163 = vmatpush1.msra.mxu0 0.0
    %164 = vmatprep.mubr.f32.mxu0 0.0
    %165 = vmatmul.mubr.f32.gmra.mrb[0].mxu0 %v89
    %v166 = vpop.f32.mrb[0].mxu0
    %v167 = vadd.f32 %v70, %v166
    %v168 = vpop.f32.mrb[0].mxu0
    %v169 = vadd.f32 %v70, %v168
    %170 = vmatprep.mubr.f32.mxu0 0.0
    %171 = vmatmul.mubr.f32.gmra.mrb[0].mxu0 %v92
    %v172 = vpop.f32.mrb[0].mxu0
    %v173 = vadd.f32 %v75, %v172
    %v174 = vpop.f32.mrb[0].mxu0
    %v175 = vadd.f32 %v75, %v174
    %176 = vmatprep.mubr.f32.mxu0 0.0
    %177 = vmatmul.mubr.f32.gmra.mrb[0].mxu0 %v95
    %v178 = vpop.f32.mrb[0].mxu0
    %v179 = vadd.f32 %v80, %v178
    %v180 = vpop.f32.mrb[0].mxu0
    %v181 = vadd.f32 %v80, %v180
    %182 = vmatprep.mubr.f32.mxu0 0.0
    %183 = vmatmul.mubr.f32.gmra.mrb[0].mxu0 %v98
    %v184 = vpop.f32.mrb[0].mxu0
    %v185 = vadd.f32 %v85, %v184
    %v186 = vpop.f32.mrb[0].mxu0
    %v187 = vadd.f32 %v85, %v186
    %188 = vdwg.mxu0
    %189 = vmatprep.subr.mxu0 %v54
    %190 = vmatpush1.msra.mxu0 %v53
    %191 = vmatprep.subr.mxu0 %v58
    %192 = vmatpush1.msra.mxu0 %v57
    %193 = vmatprep.subr.mxu0 %v62
    %194 = vmatpush1.msra.mxu0 %v61
    %195 = vmatprep.subr.mxu0 %v66
    %196 = vmatpush1.msra.mxu0 %v65
    %197 = vmatprep.subr.mxu0 0.0
    %198 = vmatpush1.msra.mxu0 0.0
    %199 = vmatprep.subr.mxu0 0.0
    %200 = vmatpush1.msra.mxu0 0.0
    %201 = vmatprep.subr.mxu0 0.0
    %202 = vmatpush1.msra.mxu0 0.0
    %203 = vmatprep.subr.mxu0 0.0
    %204 = vmatpush1.msra.mxu0 0.0
    %205 = vmatprep.subr.mxu0 0.0
    %206 = vmatpush1.msra.mxu0 0.0
    %207 = vmatprep.subr.mxu0 0.0
    %208 = vmatpush1.msra.mxu0 0.0
    %209 = vmatprep.subr.mxu0 0.0
    %210 = vmatpush1.msra.mxu0 0.0
    %211 = vmatprep.subr.mxu0 0.0
    %212 = vmatpush1.msra.mxu0 0.0
    %213 = vmatprep.subr.mxu0 0.0
    %214 = vmatpush1.msra.mxu0 0.0
    %215 = vmatprep.subr.mxu0 0.0
    %216 = vmatpush1.msra.mxu0 0.0
    %217 = vmatprep.subr.mxu0 0.0
    %218 = vmatpush1.msra.mxu0 0.0
    %219 = vmatprep.subr.mxu0 0.0
    %220 = vmatpush1.msra.mxu0 0.0
    %221 = vmatprep.subr.mxu0 0.0
    %222 = vmatpush1.msra.mxu0 0.0
    %223 = vmatprep.subr.mxu0 0.0
    %224 = vmatpush1.msra.mxu0 0.0
    %225 = vmatprep.subr.mxu0 0.0
    %226 = vmatpush1.msra.mxu0 0.0
    %227 = vmatprep.subr.mxu0 0.0
    %228 = vmatpush1.msra.mxu0 0.0
    %229 = vmatprep.subr.mxu0 0.0
    %230 = vmatpush1.msra.mxu0 0.0
    %231 = vmatprep.subr.mxu0 0.0
    %232 = vmatpush1.msra.mxu0 0.0
    %233 = vmatprep.subr.mxu0 0.0
    %234 = vmatpush1.msra.mxu0 0.0
    %235 = vmatprep.subr.mxu0 0.0
    %236 = vmatpush1.msra.mxu0 0.0
    %237 = vmatprep.subr.mxu0 0.0
    %238 = vmatpush1.msra.mxu0 0.0
    %239 = vmatprep.subr.mxu0 0.0
    %240 = vmatpush1.msra.mxu0 0.0
    %241 = vmatprep.subr.mxu0 0.0
    %242 = vmatpush1.msra.mxu0 0.0
    %243 = vmatprep.subr.mxu0 0.0
    %244 = vmatpush1.msra.mxu0 0.0
    %245 = vmatprep.subr.mxu0 0.0
    %246 = vmatpush1.msra.mxu0 0.0
    %247 = vmatprep.subr.mxu0 0.0
    %248 = vmatpush1.msra.mxu0 0.0
    %249 = vmatprep.subr.mxu0 0.0
    %250 = vmatpush1.msra.mxu0 0.0
    %251 = vmatprep.subr.mxu0 0.0
    %252 = vmatpush1.msra.mxu0 0.0
    %253 = vmatprep.mubr.f32.mxu0 0.0
    %254 = vmatmul.mubr.f32.gmra.mrb[0].mxu0 %v89
    %v255 = vpop.f32.mrb[0].mxu0
    %v256 = vadd.f32 %v70, %v255
    %v257 = vpop.f32.mrb[0].mxu0
    %v258 = vadd.f32 %v70, %v257
    %259 = vmatprep.mubr.f32.mxu0 0.0
    %260 = vmatmul.mubr.f32.gmra.mrb[0].mxu0 %v92
    %v261 = vpop.f32.mrb[0].mxu0
    %v262 = vadd.f32 %v75, %v261
    %v263 = vpop.f32.mrb[0].mxu0
    %v264 = vadd.f32 %v75, %v263
    %265 = vmatprep.mubr.f32.mxu0 0.0
    %266 = vmatmul.mubr.f32.gmra.mrb[0].mxu0 %v95
    %v267 = vpop.f32.mrb[0].mxu0
    %v268 = vadd.f32 %v80, %v267
    %v269 = vpop.f32.mrb[0].mxu0
    %v270 = vadd.f32 %v80, %v269
    %271 = vmatprep.mubr.f32.mxu0 0.0
    %272 = vmatmul.mubr.f32.gmra.mrb[0].mxu0 %v98
    %v273 = vpop.f32.mrb[0].mxu0
    %v274 = vadd.f32 %v85, %v273
    %v275 = vpop.f32.mrb[0].mxu0
    %v276 = vadd.f32 %v85, %v275
    %277 = vdwg.mxu0
    %v278 = vmax.f32 %v167, 0.0
    %v279 = vmax.f32 %v169, 0.0
    %v280 = vmax.f32 %v256, 0.0
    %v281 = vmax.f32 %v258, 0.0
    %v282 = vmax.f32 %v173, 0.0
    %v283 = vmax.f32 %v175, 0.0
    %v284 = vmax.f32 %v262, 0.0
    %v285 = vmax.f32 %v264, 0.0
    %v286 = vmax.f32 %v179, 0.0
    %v287 = vmax.f32 %v181, 0.0
    %v288 = vmax.f32 %v268, 0.0
    %v289 = vmax.f32 %v270, 0.0
    %v290 = vmax.f32 %v185, 0.0
    %v291 = vmax.f32 %v187, 0.0
    %v292 = vmax.f32 %v274, 0.0
    %v293 = vmax.f32 %v276, 0.0
    %295 = vset.pattern.permute.xlu0 0
    %296 = vperm.xlu0 %295, %v47
    %v297 = vpop.permute.xlu0 %296
    %300 = vset.pattern.permute.xlu0 0
    %301 = vperm.xlu0 %300, %v48
    %v302 = vpop.permute.xlu0 %301
    %305 = vset.pattern.permute.xlu0 0
    %306 = vperm.xlu0 %305, %v49
    %v307 = vpop.permute.xlu0 %306
    %310 = vset.pattern.permute.xlu0 0
    %311 = vperm.xlu0 %310, %v50
    %v312 = vpop.permute.xlu0 %311
    %v315 = vsel %vm87, %v39, 0
    %v318 = vsel %vm87, %v40, 0
    %v321 = vsel %vm87, %v41, 0
    %v324 = vsel %vm87, %v42, 0
    %326 = vmatprep.subr.mxu0 %v279
    %327 = vmatpush1.msra.mxu0 %v278
    %328 = vmatprep.subr.mxu0 %v283
    %329 = vmatpush1.msra.mxu0 %v282
    %330 = vmatprep.subr.mxu0 %v287
    %331 = vmatpush1.msra.mxu0 %v286
    %332 = vmatprep.subr.mxu0 %v291
    %333 = vmatpush1.msra.mxu0 %v290
    %334 = vmatprep.subr.mxu0 0.0
    %335 = vmatpush1.msra.mxu0 0.0
    %336 = vmatprep.subr.mxu0 0.0
    %337 = vmatpush1.msra.mxu0 0.0
    %338 = vmatprep.subr.mxu0 0.0
    %339 = vmatpush1.msra.mxu0 0.0
    %340 = vmatprep.subr.mxu0 0.0
    %341 = vmatpush1.msra.mxu0 0.0
    %342 = vmatprep.subr.mxu0 0.0
    %343 = vmatpush1.msra.mxu0 0.0
    %344 = vmatprep.subr.mxu0 0.0
    %345 = vmatpush1.msra.mxu0 0.0
    %346 = vmatprep.subr.mxu0 0.0
    %347 = vmatpush1.msra.mxu0 0.0
    %348 = vmatprep.subr.mxu0 0.0
    %349 = vmatpush1.msra.mxu0 0.0
    %350 = vmatprep.subr.mxu0 0.0
    %351 = vmatpush1.msra.mxu0 0.0
    %352 = vmatprep.subr.mxu0 0.0
    %353 = vmatpush1.msra.mxu0 0.0
    %354 = vmatprep.subr.mxu0 0.0
    %355 = vmatpush1.msra.mxu0 0.0
    %356 = vmatprep.subr.mxu0 0.0
    %357 = vmatpush1.msra.mxu0 0.0
    %358 = vmatprep.subr.mxu0 0.0
    %359 = vmatpush1.msra.mxu0 0.0
    %360 = vmatprep.subr.mxu0 0.0
    %361 = vmatpush1.msra.mxu0 0.0
    %362 = vmatprep.subr.mxu0 0.0
    %363 = vmatpush1.msra.mxu0 0.0
    %364 = vmatprep.subr.mxu0 0.0
    %365 = vmatpush1.msra.mxu0 0.0
    %366 = vmatprep.subr.mxu0 0.0
    %367 = vmatpush1.msra.mxu0 0.0
    %368 = vmatprep.subr.mxu0 0.0
    %369 = vmatpush1.msra.mxu0 0.0
    %370 = vmatprep.subr.mxu0 0.0
    %371 = vmatpush1.msra.mxu0 0.0
    %372 = vmatprep.subr.mxu0 0.0
    %373 = vmatpush1.msra.mxu0 0.0
    %374 = vmatprep.subr.mxu0 0.0
    %375 = vmatpush1.msra.mxu0 0.0
    %376 = vmatprep.subr.mxu0 0.0
    %377 = vmatpush1.msra.mxu0 0.0
    %378 = vmatprep.subr.mxu0 0.0
    %379 = vmatpush1.msra.mxu0 0.0
    %380 = vmatprep.subr.mxu0 0.0
    %381 = vmatpush1.msra.mxu0 0.0
    %382 = vmatprep.subr.mxu0 0.0
    %383 = vmatpush1.msra.mxu0 0.0
    %384 = vmatprep.subr.mxu0 0.0
    %385 = vmatpush1.msra.mxu0 0.0
    %386 = vmatprep.subr.mxu0 0.0
    %387 = vmatpush1.msra.mxu0 0.0
    %388 = vmatprep.subr.mxu0 0.0
    %389 = vmatpush1.msra.mxu0 0.0
    %390 = vmatprep.mubr.f32.mxu0 0.0
    %391 = vmatmul.mubr.f32.gmra.mrb[0].mxu0 %v315
    %v392 = vpop.f32.mrb[0].mxu0
    %v393 = vadd.f32 %v297, %v392
    %v394 = vpop.f32.mrb[0].mxu0
    %v395 = vadd.f32 %v297, %v394
    %396 = vmatprep.mubr.f32.mxu0 0.0
    %397 = vmatmul.mubr.f32.gmra.mrb[0].mxu0 %v318
    %v398 = vpop.f32.mrb[0].mxu0
    %v399 = vadd.f32 %v302, %v398
    %v400 = vpop.f32.mrb[0].mxu0
    %v401 = vadd.f32 %v302, %v400
    %402 = vmatprep.mubr.f32.mxu0 0.0
    %403 = vmatmul.mubr.f32.gmra.mrb[0].mxu0 %v321
    %v404 = vpop.f32.mrb[0].mxu0
    %v405 = vadd.f32 %v307, %v404
    %v406 = vpop.f32.mrb[0].mxu0
    %v407 = vadd.f32 %v307, %v406
    %408 = vmatprep.mubr.f32.mxu0 0.0
    %409 = vmatmul.mubr.f32.gmra.mrb[0].mxu0 %v324
    %v410 = vpop.f32.mrb[0].mxu0
    %v411 = vadd.f32 %v312, %v410
    %v412 = vpop.f32.mrb[0].mxu0
    %v413 = vadd.f32 %v312, %v412
    %414 = vdwg.mxu0
    %415 = vmatprep.subr.mxu0 %v281
    %416 = vmatpush1.msra.mxu0 %v280
    %417 = vmatprep.subr.mxu0 %v285
    %418 = vmatpush1.msra.mxu0 %v284
    %419 = vmatprep.subr.mxu0 %v289
    %420 = vmatpush1.msra.mxu0 %v288
    %421 = vmatprep.subr.mxu0 %v293
    %422 = vmatpush1.msra.mxu0 %v292
    %423 = vmatprep.subr.mxu0 0.0
    %424 = vmatpush1.msra.mxu0 0.0
    %425 = vmatprep.subr.mxu0 0.0
    %426 = vmatpush1.msra.mxu0 0.0
    %427 = vmatprep.subr.mxu0 0.0
    %428 = vmatpush1.msra.mxu0 0.0
    %429 = vmatprep.subr.mxu0 0.0
    %430 = vmatpush1.msra.mxu0 0.0
    %431 = vmatprep.subr.mxu0 0.0
    %432 = vmatpush1.msra.mxu0 0.0
    %433 = vmatprep.subr.mxu0 0.0
    %434 = vmatpush1.msra.mxu0 0.0
    %435 = vmatprep.subr.mxu0 0.0
    %436 = vmatpush1.msra.mxu0 0.0
    %437 = vmatprep.subr.mxu0 0.0
    %438 = vmatpush1.msra.mxu0 0.0
    %439 = vmatprep.subr.mxu0 0.0
    %440 = vmatpush1.msra.mxu0 0.0
    %441 = vmatprep.subr.mxu0 0.0
    %442 = vmatpush1.msra.mxu0 0.0
    %443 = vmatprep.subr.mxu0 0.0
    %444 = vmatpush1.msra.mxu0 0.0
    %445 = vmatprep.subr.mxu0 0.0
    %446 = vmatpush1.msra.mxu0 0.0
    %447 = vmatprep.subr.mxu0 0.0
    %448 = vmatpush1.msra.mxu0 0.0
    %449 = vmatprep.subr.mxu0 0.0
    %450 = vmatpush1.msra.mxu0 0.0
    %451 = vmatprep.subr.mxu0 0.0
    %452 = vmatpush1.msra.mxu0 0.0
    %453 = vmatprep.subr.mxu0 0.0
    %454 = vmatpush1.msra.mxu0 0.0
    %455 = vmatprep.subr.mxu0 0.0
    %456 = vmatpush1.msra.mxu0 0.0
    %457 = vmatprep.subr.mxu0 0.0
    %458 = vmatpush1.msra.mxu0 0.0
    %459 = vmatprep.subr.mxu0 0.0
    %460 = vmatpush1.msra.mxu0 0.0
    %461 = vmatprep.subr.mxu0 0.0
    %462 = vmatpush1.msra.mxu0 0.0
    %463 = vmatprep.subr.mxu0 0.0
    %464 = vmatpush1.msra.mxu0 0.0
    %465 = vmatprep.subr.mxu0 0.0
    %466 = vmatpush1.msra.mxu0 0.0
    %467 = vmatprep.subr.mxu0 0.0
    %468 = vmatpush1.msra.mxu0 0.0
    %469 = vmatprep.subr.mxu0 0.0
    %470 = vmatpush1.msra.mxu0 0.0
    %471 = vmatprep.subr.mxu0 0.0
    %472 = vmatpush1.msra.mxu0 0.0
    %473 = vmatprep.subr.mxu0 0.0
    %474 = vmatpush1.msra.mxu0 0.0
    %475 = vmatprep.subr.mxu0 0.0
    %476 = vmatpush1.msra.mxu0 0.0
    %477 = vmatprep.subr.mxu0 0.0
    %478 = vmatpush1.msra.mxu0 0.0
    %479 = vmatprep.mubr.f32.mxu0 0.0
    %480 = vmatmul.mubr.f32.gmra.mrb[0].mxu0 %v315
    %v481 = vpop.f32.mrb[0].mxu0
    %v482 = vadd.f32 %v297, %v481
    %v483 = vpop.f32.mrb[0].mxu0
    %v484 = vadd.f32 %v297, %v483
    %485 = vmatprep.mubr.f32.mxu0 0.0
    %486 = vmatmul.mubr.f32.gmra.mrb[0].mxu0 %v318
    %v487 = vpop.f32.mrb[0].mxu0
    %v488 = vadd.f32 %v302, %v487
    %v489 = vpop.f32.mrb[0].mxu0
    %v490 = vadd.f32 %v302, %v489
    %491 = vmatprep.mubr.f32.mxu0 0.0
    %492 = vmatmul.mubr.f32.gmra.mrb[0].mxu0 %v321
    %v493 = vpop.f32.mrb[0].mxu0
    %v494 = vadd.f32 %v307, %v493
    %v495 = vpop.f32.mrb[0].mxu0
    %v496 = vadd.f32 %v307, %v495
    %497 = vmatprep.mubr.f32.mxu0 0.0
    %498 = vmatmul.mubr.f32.gmra.mrb[0].mxu0 %v324
    %v499 = vpop.f32.mrb[0].mxu0
    %v500 = vadd.f32 %v312, %v499
    %v501 = vpop.f32.mrb[0].mxu0
    %v502 = vadd.f32 %v312, %v501
    %503 = vdwg.mxu0
    %v504 = vadd.f32 %v393, %v51
    %v505 = vadd.f32 %v395, %v52
    %v506 = vadd.f32 %v482, %v53
    %v507 = vadd.f32 %v484, %v54
    %v508 = vadd.f32 %v399, %v55
    %v509 = vadd.f32 %v401, %v56
    %v510 = vadd.f32 %v488, %v57
    %v511 = vadd.f32 %v490, %v58
    %v512 = vadd.f32 %v405, %v59
    %v513 = vadd.f32 %v407, %v60
    %v514 = vadd.f32 %v494, %v61
    %v515 = vadd.f32 %v496, %v62
    %v516 = vadd.f32 %v411, %v63
    %v517 = vadd.f32 %v413, %v64
    %v518 = vadd.f32 %v500, %v65
    %v519 = vadd.f32 %v502, %v66
    %520 = vst [vmem:[#allocation5] sm:$0xff] %v504
    %521 = vst [vmem:[#allocation5 + $0x8] sm:$0xff] %v505
    %522 = vst [vmem:[#allocation5 + $0x10] sm:$0xff] %v506
    %523 = vst [vmem:[#allocation5 + $0x18] sm:$0xff] %v507
    %524 = vst [vmem:[#allocation5 + $0x20] sm:$0xff] %v508
    %525 = vst [vmem:[#allocation5 + $0x28] sm:$0xff] %v509
    %526 = vst [vmem:[#allocation5 + $0x30] sm:$0xff] %v510
    %527 = vst [vmem:[#allocation5 + $0x38] sm:$0xff] %v511
    %528 = vst [vmem:[#allocation5 + $0x40] sm:$0xff] %v512
    %529 = vst [vmem:[#allocation5 + $0x48] sm:$0xff] %v513
    %530 = vst [vmem:[#allocation5 + $0x50] sm:$0xff] %v514
    %531 = vst [vmem:[#allocation5 + $0x58] sm:$0xff] %v515
    %532 = vst [vmem:[#allocation5 + $0x60] sm:$0xff] %v516
    %533 = vst [vmem:[#allocation5 + $0x68] sm:$0xff] %v517
    %534 = vst [vmem:[#allocation5 + $0x70] sm:$0xff] %v518
    %535 = vst [vmem:[#allocation5 + $0x78] sm:$0xff] %v519
    %s536 = scalar_lea.vmem [#allocation2], 128
    %v537 = vld [vmem:[%s536] sm:$0xff]
    %v538 = vld [vmem:[%s536 + $0x8] sm:$0xff]
    %v539 = vld [vmem:[%s536 + $0x10] sm:$0xff]
    %v540 = vld [vmem:[%s536 + $0x18] sm:$0xff]
    %v541 = vld [vmem:[%s536 + $0x20] sm:$0xff]
    %v542 = vld [vmem:[%s536 + $0x28] sm:$0xff]
    %v543 = vld [vmem:[%s536 + $0x30] sm:$0xff]
    %v544 = vld [vmem:[%s536 + $0x38] sm:$0xff]
    %v545 = vld [vmem:[%s536 + $0x40] sm:$0xff]
    %v546 = vld [vmem:[%s536 + $0x48] sm:$0xff]
    %v547 = vld [vmem:[%s536 + $0x50] sm:$0xff]
    %v548 = vld [vmem:[%s536 + $0x58] sm:$0xff]
    %v549 = vld [vmem:[%s536 + $0x60] sm:$0xff]
    %v550 = vld [vmem:[%s536 + $0x68] sm:$0xff]
    %v551 = vld [vmem:[%s536 + $0x70] sm:$0xff]
    %v552 = vld [vmem:[%s536 + $0x78] sm:$0xff]
    %553 = vmatprep.subr.mxu0 %v538
    %554 = vmatpush1.msra.mxu0 %v537
    %555 = vmatprep.subr.mxu0 %v542
    %556 = vmatpush1.msra.mxu0 %v541
    %557 = vmatprep.subr.mxu0 %v546
    %558 = vmatpush1.msra.mxu0 %v545
    %559 = vmatprep.subr.mxu0 %v550
    %560 = vmatpush1.msra.mxu0 %v549
    %561 = vmatprep.subr.mxu0 0.0
    %562 = vmatpush1.msra.mxu0 0.0
    %563 = vmatprep.subr.mxu0 0.0
    %564 = vmatpush1.msra.mxu0 0.0
    %565 = vmatprep.subr.mxu0 0.0
    %566 = vmatpush1.msra.mxu0 0.0
    %567 = vmatprep.subr.mxu0 0.0
    %568 = vmatpush1.msra.mxu0 0.0
    %569 = vmatprep.subr.mxu0 0.0
    %570 = vmatpush1.msra.mxu0 0.0
    %571 = vmatprep.subr.mxu0 0.0
    %572 = vmatpush1.msra.mxu0 0.0
    %573 = vmatprep.subr.mxu0 0.0
    %574 = vmatpush1.msra.mxu0 0.0
    %575 = vmatprep.subr.mxu0 0.0
    %576 = vmatpush1.msra.mxu0 0.0
    %577 = vmatprep.subr.mxu0 0.0
    %578 = vmatpush1.msra.mxu0 0.0
    %579 = vmatprep.subr.mxu0 0.0
    %580 = vmatpush1.msra.mxu0 0.0
    %581 = vmatprep.subr.mxu0 0.0
    %582 = vmatpush1.msra.mxu0 0.0
    %583 = vmatprep.subr.mxu0 0.0
    %584 = vmatpush1.msra.mxu0 0.0
    %585 = vmatprep.subr.mxu0 0.0
    %586 = vmatpush1.msra.mxu0 0.0
    %587 = vmatprep.subr.mxu0 0.0
    %588 = vmatpush1.msra.mxu0 0.0
    %589 = vmatprep.subr.mxu0 0.0
    %590 = vmatpush1.msra.mxu0 0.0
    %591 = vmatprep.subr.mxu0 0.0
    %592 = vmatpush1.msra.mxu0 0.0
    %593 = vmatprep.subr.mxu0 0.0
    %594 = vmatpush1.msra.mxu0 0.0
    %595 = vmatprep.subr.mxu0 0.0
    %596 = vmatpush1.msra.mxu0 0.0
    %597 = vmatprep.subr.mxu0 0.0
    %598 = vmatpush1.msra.mxu0 0.0
    %599 = vmatprep.subr.mxu0 0.0
    %600 = vmatpush1.msra.mxu0 0.0
    %601 = vmatprep.subr.mxu0 0.0
    %602 = vmatpush1.msra.mxu0 0.0
    %603 = vmatprep.subr.mxu0 0.0
    %604 = vmatpush1.msra.mxu0 0.0
    %605 = vmatprep.subr.mxu0 0.0
    %606 = vmatpush1.msra.mxu0 0.0
    %607 = vmatprep.subr.mxu0 0.0
    %608 = vmatpush1.msra.mxu0 0.0
    %609 = vmatprep.subr.mxu0 0.0
    %610 = vmatpush1.msra.mxu0 0.0
    %611 = vmatprep.subr.mxu0 0.0
    %612 = vmatpush1.msra.mxu0 0.0
    %613 = vmatprep.subr.mxu0 0.0
    %614 = vmatpush1.msra.mxu0 0.0
    %615 = vmatprep.subr.mxu0 0.0
    %616 = vmatpush1.msra.mxu0 0.0
    %617 = vmatprep.mubr.f32.mxu0 0.0
    %618 = vmatmul.mubr.f32.gmra.mrb[0].mxu0 %v89
    %v619 = vpop.f32.mrb[0].mxu0
    %v620 = vadd.f32 %v70, %v619
    %v621 = vpop.f32.mrb[0].mxu0
    %v622 = vadd.f32 %v70, %v621
    %623 = vmatprep.mubr.f32.mxu0 0.0
    %624 = vmatmul.mubr.f32.gmra.mrb[0].mxu0 %v92
    %v625 = vpop.f32.mrb[0].mxu0
    %v626 = vadd.f32 %v75, %v625
    %v627 = vpop.f32.mrb[0].mxu0
    %v628 = vadd.f32 %v75, %v627
    %629 = vmatprep.mubr.f32.mxu0 0.0
    %630 = vmatmul.mubr.f32.gmra.mrb[0].mxu0 %v95
    %v631 = vpop.f32.mrb[0].mxu0
    %v632 = vadd.f32 %v80, %v631
    %v633 = vpop.f32.mrb[0].mxu0
    %v634 = vadd.f32 %v80, %v633
    %635 = vmatprep.mubr.f32.mxu0 0.0
    %636 = vmatmul.mubr.f32.gmra.mrb[0].mxu0 %v98
    %v637 = vpop.f32.mrb[0].mxu0
    %v638 = vadd.f32 %v85, %v637
    %v639 = vpop.f32.mrb[0].mxu0
    %v640 = vadd.f32 %v85, %v639
    %641 = vdwg.mxu0
    %642 = vmatprep.subr.mxu0 %v540
    %643 = vmatpush1.msra.mxu0 %v539
    %644 = vmatprep.subr.mxu0 %v544
    %645 = vmatpush1.msra.mxu0 %v543
    %646 = vmatprep.subr.mxu0 %v548
    %647 = vmatpush1.msra.mxu0 %v547
    %648 = vmatprep.subr.mxu0 %v552
    %649 = vmatpush1.msra.mxu0 %v551
    %650 = vmatprep.subr.mxu0 0.0
    %651 = vmatpush1.msra.mxu0 0.0
    %652 = vmatprep.subr.mxu0 0.0
    %653 = vmatpush1.msra.mxu0 0.0
    %654 = vmatprep.subr.mxu0 0.0
    %655 = vmatpush1.msra.mxu0 0.0
    %656 = vmatprep.subr.mxu0 0.0
    %657 = vmatpush1.msra.mxu0 0.0
    %658 = vmatprep.subr.mxu0 0.0
    %659 = vmatpush1.msra.mxu0 0.0
    %660 = vmatprep.subr.mxu0 0.0
    %661 = vmatpush1.msra.mxu0 0.0
    %662 = vmatprep.subr.mxu0 0.0
    %663 = vmatpush1.msra.mxu0 0.0
    %664 = vmatprep.subr.mxu0 0.0
    %665 = vmatpush1.msra.mxu0 0.0
    %666 = vmatprep.subr.mxu0 0.0
    %667 = vmatpush1.msra.mxu0 0.0
    %668 = vmatprep.subr.mxu0 0.0
    %669 = vmatpush1.msra.mxu0 0.0
    %670 = vmatprep.subr.mxu0 0.0
    %671 = vmatpush1.msra.mxu0 0.0
    %672 = vmatprep.subr.mxu0 0.0
    %673 = vmatpush1.msra.mxu0 0.0
    %674 = vmatprep.subr.mxu0 0.0
    %675 = vmatpush1.msra.mxu0 0.0
    %676 = vmatprep.subr.mxu0 0.0
    %677 = vmatpush1.msra.mxu0 0.0
    %678 = vmatprep.subr.mxu0 0.0
    %679 = vmatpush1.msra.mxu0 0.0
    %680 = vmatprep.subr.mxu0 0.0
    %681 = vmatpush1.msra.mxu0 0.0
    %682 = vmatprep.subr.mxu0 0.0
    %683 = vmatpush1.msra.mxu0 0.0
    %684 = vmatprep.subr.mxu0 0.0
    %685 = vmatpush1.msra.mxu0 0.0
    %686 = vmatprep.subr.mxu0 0.0
    %687 = vmatpush1.msra.mxu0 0.0
    %688 = vmatprep.subr.mxu0 0.0
    %689 = vmatpush1.msra.mxu0 0.0
    %690 = vmatprep.subr.mxu0 0.0
    %691 = vmatpush1.msra.mxu0 0.0
    %692 = vmatprep.subr.mxu0 0.0
    %693 = vmatpush1.msra.mxu0 0.0
    %694 = vmatprep.subr.mxu0 0.0
    %695 = vmatpush1.msra.mxu0 0.0
    %696 = vmatprep.subr.mxu0 0.0
    %697 = vmatpush1.msra.mxu0 0.0
    %698 = vmatprep.subr.mxu0 0.0
    %699 = vmatpush1.msra.mxu0 0.0
    %700 = vmatprep.subr.mxu0 0.0
    %701 = vmatpush1.msra.mxu0 0.0
    %702 = vmatprep.subr.mxu0 0.0
    %703 = vmatpush1.msra.mxu0 0.0
    %704 = vmatprep.subr.mxu0 0.0
    %705 = vmatpush1.msra.mxu0 0.0
    %706 = vmatprep.mubr.f32.mxu0 0.0
    %707 = vmatmul.mubr.f32.gmra.mrb[0].mxu0 %v89
    %v708 = vpop.f32.mrb[0].mxu0
    %v709 = vadd.f32 %v70, %v708
    %v710 = vpop.f32.mrb[0].mxu0
    %v711 = vadd.f32 %v70, %v710
    %712 = vmatprep.mubr.f32.mxu0 0.0
    %713 = vmatmul.mubr.f32.gmra.mrb[0].mxu0 %v92
    %v714 = vpop.f32.mrb[0].mxu0
    %v715 = vadd.f32 %v75, %v714
    %v716 = vpop.f32.mrb[0].mxu0
    %v717 = vadd.f32 %v75, %v716
    %718 = vmatprep.mubr.f32.mxu0 0.0
    %719 = vmatmul.mubr.f32.gmra.mrb[0].mxu0 %v95
    %v720 = vpop.f32.mrb[0].mxu0
    %v721 = vadd.f32 %v80, %v720
    %v722 = vpop.f32.mrb[0].mxu0
    %v723 = vadd.f32 %v80, %v722
    %724 = vmatprep.mubr.f32.mxu0 0.0
    %725 = vmatmul.mubr.f32.gmra.mrb[0].mxu0 %v98
    %v726 = vpop.f32.mrb[0].mxu0
    %v727 = vadd.f32 %v85, %v726
    %v728 = vpop.f32.mrb[0].mxu0
    %v729 = vadd.f32 %v85, %v728
    %730 = vdwg.mxu0
    %v731 = vmax.f32 %v620, 0.0
    %v732 = vmax.f32 %v622, 0.0
    %v733 = vmax.f32 %v709, 0.0
    %v734 = vmax.f32 %v711, 0.0
    %v735 = vmax.f32 %v626, 0.0
    %v736 = vmax.f32 %v628, 0.0
    %v737 = vmax.f32 %v715, 0.0
    %v738 = vmax.f32 %v717, 0.0
    %v739 = vmax.f32 %v632, 0.0
    %v740 = vmax.f32 %v634, 0.0
    %v741 = vmax.f32 %v721, 0.0
    %v742 = vmax.f32 %v723, 0.0
    %v743 = vmax.f32 %v638, 0.0
    %v744 = vmax.f32 %v640, 0.0
    %v745 = vmax.f32 %v727, 0.0
    %v746 = vmax.f32 %v729, 0.0
    %747 = vmatprep.subr.mxu0 %v732
    %748 = vmatpush1.msra.mxu0 %v731
    %749 = vmatprep.subr.mxu0 %v736
    %750 = vmatpush1.msra.mxu0 %v735
    %751 = vmatprep.subr.mxu0 %v740
    %752 = vmatpush1.msra.mxu0 %v739
    %753 = vmatprep.subr.mxu0 %v744
    %754 = vmatpush1.msra.mxu0 %v743
    %755 = vmatprep.subr.mxu0 0.0
    %756 = vmatpush1.msra.mxu0 0.0
    %757 = vmatprep.subr.mxu0 0.0
    %758 = vmatpush1.msra.mxu0 0.0
    %759 = vmatprep.subr.mxu0 0.0
    %760 = vmatpush1.msra.mxu0 0.0
    %761 = vmatprep.subr.mxu0 0.0
    %762 = vmatpush1.msra.mxu0 0.0
    %763 = vmatprep.subr.mxu0 0.0
    %764 = vmatpush1.msra.mxu0 0.0
    %765 = vmatprep.subr.mxu0 0.0
    %766 = vmatpush1.msra.mxu0 0.0
    %767 = vmatprep.subr.mxu0 0.0
    %768 = vmatpush1.msra.mxu0 0.0
    %769 = vmatprep.subr.mxu0 0.0
    %770 = vmatpush1.msra.mxu0 0.0
    %771 = vmatprep.subr.mxu0 0.0
    %772 = vmatpush1.msra.mxu0 0.0
    %773 = vmatprep.subr.mxu0 0.0
    %774 = vmatpush1.msra.mxu0 0.0
    %775 = vmatprep.subr.mxu0 0.0
    %776 = vmatpush1.msra.mxu0 0.0
    %777 = vmatprep.subr.mxu0 0.0
    %778 = vmatpush1.msra.mxu0 0.0
    %779 = vmatprep.subr.mxu0 0.0
    %780 = vmatpush1.msra.mxu0 0.0
    %781 = vmatprep.subr.mxu0 0.0
    %782 = vmatpush1.msra.mxu0 0.0
    %783 = vmatprep.subr.mxu0 0.0
    %784 = vmatpush1.msra.mxu0 0.0
    %785 = vmatprep.subr.mxu0 0.0
    %786 = vmatpush1.msra.mxu0 0.0
    %787 = vmatprep.subr.mxu0 0.0
    %788 = vmatpush1.msra.mxu0 0.0
    %789 = vmatprep.subr.mxu0 0.0
    %790 = vmatpush1.msra.mxu0 0.0
    %791 = vmatprep.subr.mxu0 0.0
    %792 = vmatpush1.msra.mxu0 0.0
    %793 = vmatprep.subr.mxu0 0.0
    %794 = vmatpush1.msra.mxu0 0.0
    %795 = vmatprep.subr.mxu0 0.0
    %796 = vmatpush1.msra.mxu0 0.0
    %797 = vmatprep.subr.mxu0 0.0
    %798 = vmatpush1.msra.mxu0 0.0
    %799 = vmatprep.subr.mxu0 0.0
    %800 = vmatpush1.msra.mxu0 0.0
    %801 = vmatprep.subr.mxu0 0.0
    %802 = vmatpush1.msra.mxu0 0.0
    %803 = vmatprep.subr.mxu0 0.0
    %804 = vmatpush1.msra.mxu0 0.0
    %805 = vmatprep.subr.mxu0 0.0
    %806 = vmatpush1.msra.mxu0 0.0
    %807 = vmatprep.subr.mxu0 0.0
    %808 = vmatpush1.msra.mxu0 0.0
    %809 = vmatprep.subr.mxu0 0.0
    %810 = vmatpush1.msra.mxu0 0.0
    %811 = vmatprep.mubr.f32.mxu0 0.0
    %812 = vmatmul.mubr.f32.gmra.mrb[0].mxu0 %v315
    %v813 = vpop.f32.mrb[0].mxu0
    %v814 = vadd.f32 %v297, %v813
    %v815 = vpop.f32.mrb[0].mxu0
    %v816 = vadd.f32 %v297, %v815
    %817 = vmatprep.mubr.f32.mxu0 0.0
    %818 = vmatmul.mubr.f32.gmra.mrb[0].mxu0 %v318
    %v819 = vpop.f32.mrb[0].mxu0
    %v820 = vadd.f32 %v302, %v819
    %v821 = vpop.f32.mrb[0].mxu0
    %v822 = vadd.f32 %v302, %v821
    %823 = vmatprep.mubr.f32.mxu0 0.0
    %824 = vmatmul.mubr.f32.gmra.mrb[0].mxu0 %v321
    %v825 = vpop.f32.mrb[0].mxu0
    %v826 = vadd.f32 %v307, %v825
    %v827 = vpop.f32.mrb[0].mxu0
    %v828 = vadd.f32 %v307, %v827
    %829 = vmatprep.mubr.f32.mxu0 0.0
    %830 = vmatmul.mubr.f32.gmra.mrb[0].mxu0 %v324
    %v831 = vpop.f32.mrb[0].mxu0
    %v832 = vadd.f32 %v312, %v831
    %v833 = vpop.f32.mrb[0].mxu0
    %v834 = vadd.f32 %v312, %v833
    %835 = vdwg.mxu0
    %836 = vmatprep.subr.mxu0 %v734
    %837 = vmatpush1.msra.mxu0 %v733
    %838 = vmatprep.subr.mxu0 %v738
    %839 = vmatpush1.msra.mxu0 %v737
    %840 = vmatprep.subr.mxu0 %v742
    %841 = vmatpush1.msra.mxu0 %v741
    %842 = vmatprep.subr.mxu0 %v746
    %843 = vmatpush1.msra.mxu0 %v745
    %844 = vmatprep.subr.mxu0 0.0
    %845 = vmatpush1.msra.mxu0 0.0
    %846 = vmatprep.subr.mxu0 0.0
    %847 = vmatpush1.msra.mxu0 0.0
    %848 = vmatprep.subr.mxu0 0.0
    %849 = vmatpush1.msra.mxu0 0.0
    %850 = vmatprep.subr.mxu0 0.0
    %851 = vmatpush1.msra.mxu0 0.0
    %852 = vmatprep.subr.mxu0 0.0
    %853 = vmatpush1.msra.mxu0 0.0
    %854 = vmatprep.subr.mxu0 0.0
    %855 = vmatpush1.msra.mxu0 0.0
    %856 = vmatprep.subr.mxu0 0.0
    %857 = vmatpush1.msra.mxu0 0.0
    %858 = vmatprep.subr.mxu0 0.0
    %859 = vmatpush1.msra.mxu0 0.0
    %860 = vmatprep.subr.mxu0 0.0
    %861 = vmatpush1.msra.mxu0 0.0
    %862 = vmatprep.subr.mxu0 0.0
    %863 = vmatpush1.msra.mxu0 0.0
    %864 = vmatprep.subr.mxu0 0.0
    %865 = vmatpush1.msra.mxu0 0.0
    %866 = vmatprep.subr.mxu0 0.0
    %867 = vmatpush1.msra.mxu0 0.0
    %868 = vmatprep.subr.mxu0 0.0
    %869 = vmatpush1.msra.mxu0 0.0
    %870 = vmatprep.subr.mxu0 0.0
    %871 = vmatpush1.msra.mxu0 0.0
    %872 = vmatprep.subr.mxu0 0.0
    %873 = vmatpush1.msra.mxu0 0.0
    %874 = vmatprep.subr.mxu0 0.0
    %875 = vmatpush1.msra.mxu0 0.0
    %876 = vmatprep.subr.mxu0 0.0
    %877 = vmatpush1.msra.mxu0 0.0
    %878 = vmatprep.subr.mxu0 0.0
    %879 = vmatpush1.msra.mxu0 0.0
    %880 = vmatprep.subr.mxu0 0.0
    %881 = vmatpush1.msra.mxu0 0.0
    %882 = vmatprep.subr.mxu0 0.0
    %883 = vmatpush1.msra.mxu0 0.0
    %884 = vmatprep.subr.mxu0 0.0
    %885 = vmatpush1.msra.mxu0 0.0
    %886 = vmatprep.subr.mxu0 0.0
    %887 = vmatpush1.msra.mxu0 0.0
    %888 = vmatprep.subr.mxu0 0.0
    %889 = vmatpush1.msra.mxu0 0.0
    %890 = vmatprep.subr.mxu0 0.0
    %891 = vmatpush1.msra.mxu0 0.0
    %892 = vmatprep.subr.mxu0 0.0
    %893 = vmatpush1.msra.mxu0 0.0
    %894 = vmatprep.subr.mxu0 0.0
    %895 = vmatpush1.msra.mxu0 0.0
    %896 = vmatprep.subr.mxu0 0.0
    %897 = vmatpush1.msra.mxu0 0.0
    %898 = vmatprep.subr.mxu0 0.0
    %899 = vmatpush1.msra.mxu0 0.0
    %900 = vmatprep.mubr.f32.mxu0 0.0
    %901 = vmatmul.mubr.f32.gmra.mrb[0].mxu0 %v315
    %v902 = vpop.f32.mrb[0].mxu0
    %v903 = vadd.f32 %v297, %v902
    %v904 = vpop.f32.mrb[0].mxu0
    %v905 = vadd.f32 %v297, %v904
    %906 = vmatprep.mubr.f32.mxu0 0.0
    %907 = vmatmul.mubr.f32.gmra.mrb[0].mxu0 %v318
    %v908 = vpop.f32.mrb[0].mxu0
    %v909 = vadd.f32 %v302, %v908
    %v910 = vpop.f32.mrb[0].mxu0
    %v911 = vadd.f32 %v302, %v910
    %912 = vmatprep.mubr.f32.mxu0 0.0
    %913 = vmatmul.mubr.f32.gmra.mrb[0].mxu0 %v321
    %v914 = vpop.f32.mrb[0].mxu0
    %v915 = vadd.f32 %v307, %v914
    %v916 = vpop.f32.mrb[0].mxu0
    %v917 = vadd.f32 %v307, %v916
    %918 = vmatprep.mubr.f32.mxu0 0.0
    %919 = vmatmul.mubr.f32.gmra.mrb[0].mxu0 %v324
    %v920 = vpop.f32.mrb[0].mxu0
    %v921 = vadd.f32 %v312, %v920
    %v922 = vpop.f32.mrb[0].mxu0
    %v923 = vadd.f32 %v312, %v922
    %924 = vdwg.mxu0
    %v925 = vadd.f32 %v814, %v537
    %v926 = vadd.f32 %v816, %v538
    %v927 = vadd.f32 %v903, %v539
    %v928 = vadd.f32 %v905, %v540
    %v929 = vadd.f32 %v820, %v541
    %v930 = vadd.f32 %v822, %v542
    %v931 = vadd.f32 %v909, %v543
    %v932 = vadd.f32 %v911, %v544
    %v933 = vadd.f32 %v826, %v545
    %v934 = vadd.f32 %v828, %v546
    %v935 = vadd.f32 %v915, %v547
    %v936 = vadd.f32 %v917, %v548
    %v937 = vadd.f32 %v832, %v549
    %v938 = vadd.f32 %v834, %v550
    %v939 = vadd.f32 %v921, %v551
    %v940 = vadd.f32 %v923, %v552
    %s941 = scalar_lea.vmem [#allocation5], 128
    %942 = vst [vmem:[%s941] sm:$0xff] %v925
    %943 = vst [vmem:[%s941 + $0x8] sm:$0xff] %v926
    %944 = vst [vmem:[%s941 + $0x10] sm:$0xff] %v927
    %945 = vst [vmem:[%s941 + $0x18] sm:$0xff] %v928
    %946 = vst [vmem:[%s941 + $0x20] sm:$0xff] %v929
    %947 = vst [vmem:[%s941 + $0x28] sm:$0xff] %v930
    %948 = vst [vmem:[%s941 + $0x30] sm:$0xff] %v931
    %949 = vst [vmem:[%s941 + $0x38] sm:$0xff] %v932
    %950 = vst [vmem:[%s941 + $0x40] sm:$0xff] %v933
    %951 = vst [vmem:[%s941 + $0x48] sm:$0xff] %v934
    %952 = vst [vmem:[%s941 + $0x50] sm:$0xff] %v935
    %953 = vst [vmem:[%s941 + $0x58] sm:$0xff] %v936
    %954 = vst [vmem:[%s941 + $0x60] sm:$0xff] %v937
    %955 = vst [vmem:[%s941 + $0x68] sm:$0xff] %v938
    %956 = vst [vmem:[%s941 + $0x70] sm:$0xff] %v939
    %957 = vst [vmem:[%s941 + $0x78] sm:$0xff] %v940
    // Predicated region
    $region26: #{tpu_custom_call.1} parent=1 // pred_check
      _
    $region27: #{tpu_custom_call.1} parent=1 // pred_check_branch
      %959 = sbr.rel (0) target = $region29
    $region28: #{tpu_custom_call.1} parent=1 // pred_region
      %s961 = ssub.s32 4096, 4096
      %962 = vsyncadd [#allocation4], %s961
      %s963 = sshll.u32 [#allocation5], 4
      %s964 = int_to_ptr.vmem [resolvable:$true] %s963
      %969 = dma.vmem_to_hbm [thread:$0]  %s964, 4096, %s5, [#allocation4], 512, 512, 32
    $region29: #{tpu_custom_call.1} parent=1 // pred_fallthru
      _
    // Predicated region
    $region30: #{tpu_custom_call.1} parent=1 // pred_check
      _
    $region31: #{tpu_custom_call.1} parent=1 // pred_check_branch
      %971 = sbr.rel (0) target = $region33
    $region32: #{tpu_custom_call.1} parent=1 // pred_region
      %972 = dma.done [#allocation4], 4096
    $region33: #{tpu_custom_call.1} parent=1 // pred_fallthru
      _
    %973 = vsyncpa [#allocation3], 1
    %974 = vsyncpa [#allocation4], 1

</llo_original>
